<compile_context>
chip_gen: v7x
topology: tpu7x:2x2x1
jax: 0.10.0
libtpu: 0.0.40
codegen_flags: <defaults>
</compile_context>

<pallas_src>
import jax
import jax.numpy as jnp
from jax import lax
from jax.experimental import pallas as pl
from jax.experimental.pallas import tpu as pltpu

# ---- model dims (small, kernel-friendly) ------------------------------------
B = 2        # batch
S = 8        # sequence length
BS = B * S   # fused rows = 16
H = 32       # hidden size
F = 64       # MLP hidden size
V = 128      # vocab size (lane-dense LM head)
EPS = 1e-5

# ---- packed bf16 weight layout: every segment starts on a 128-lane boundary -
SEG = 128
OFF_WLM = 0 * SEG        # (H, V)  lnf_g folded in
OFF_QKV = 1 * SEG        # q @ +0, k @ +128, v @ +256 (each (H, H), padded)
OFF_WO = 4 * SEG         # (H, H)
OFF_W1 = 5 * SEG         # (H, F)  ln2_g folded in
OFF_W2T = 6 * SEG        # (H, F)  = w2^T
WPACK_COLS = 7 * SEG     # 896

# ---- f32 aux operand layout: rows x 128 lanes --------------------------------
ROW_MASK = 0             # rows  0:16, cols 0:16  additive causal mask (0 / -1e30)
ROW_WPE = BS             # rows 16:32, cols 0:32  positional embeddings tiled (BS, H)
ROW_LB = 2 * BS          # row 32, cols 0:128     lnf_b @ wlm
ROW_QB = ROW_LB + 1      # row 33, cols 0:32      (ln1_b @ wq) / sqrt(H)
ROW_KB = ROW_LB + 2      # row 34, cols 0:32      ln1_b @ wk
ROW_VB = ROW_LB + 3      # row 35, cols 0:32      ln1_b @ wv
ROW_1B = ROW_LB + 4      # row 36, cols 0:64      ln2_b @ w1
AUX_ROWS = 40


def _ln(h):
    """LayerNorm WITHOUT gamma/beta (those are folded into the weights)."""
    mu = jnp.mean(h, axis=-1, keepdims=True)
    var = jnp.mean((h - mu) * (h - mu), axis=-1, keepdims=True)
    return (h - mu) * lax.rsqrt(var + EPS)


def lm_kernel(ids_ref, wte_ref, wpack_ref, aux_ref, out_ref):
    # ids_ref:   (BS, 1)    int32  fused (batch*seq) token ids
    # wte_ref:   (V, H)     bf16   token embedding table
    # wpack_ref: (H, 896)   bf16   [wlm | wq | wk | wv | wo | w1 | w2^T], 128-aligned
    # aux_ref:   (40, 128)  f32    [mask bias | wpe | logit/q/k/v/h1 bias rows]
    # out_ref:   (BS, V)    f32    logits

    # ---- embedding gather as one-hot matmul on the MXU + positional add -----
    onehot = (ids_ref[...] ==
              lax.broadcasted_iota(jnp.int32, (BS, V), 1)).astype(jnp.bfloat16)
    x = jnp.dot(onehot, wte_ref[...], preferred_element_type=jnp.float32)
    x = x + aux_ref[ROW_WPE:ROW_WPE + BS, 0:H]            # residual stream: f32

    # ---- causal self-attention (single head, fused QKV) ---------------------
    h = _ln(x).astype(jnp.bfloat16)
    qkv = jnp.dot(h, wpack_ref[:, OFF_QKV:OFF_QKV + 3 * SEG],
                  preferred_element_type=jnp.float32)      # (BS, 384) f32
    # q already carries the 1/sqrt(H) scale (folded into its weight columns).
    q = (qkv[:, 0:H] + aux_ref[ROW_QB:ROW_QB + 1, 0:H]).astype(jnp.bfloat16)
    k = (qkv[:, SEG:SEG + H] + aux_ref[ROW_KB:ROW_KB + 1, 0:H]).astype(jnp.bfloat16)
    v = (qkv[:, 2 * SEG:2 * SEG + H] + aux_ref[ROW_VB:ROW_VB + 1, 0:H]
         ).astype(jnp.bfloat16)

    # q @ k^T without materializing a transpose: contract last axis of both.
    scores = lax.dot_general(q, k, (((1,), (1,)), ((), ())),
                             preferred_element_type=jnp.float32)    # (BS, BS)
    scores = scores + aux_ref[ROW_MASK:ROW_MASK + BS, 0:BS]         # additive mask

    # explicit softmax (f32); normalization uses the EUP approx reciprocal.
    m = jnp.max(scores, axis=-1, keepdims=True)
    e = jnp.exp(scores - m)
    denom = jnp.sum(e, axis=-1, keepdims=True)
    p = (e * pl.reciprocal(denom, approx=True)).astype(jnp.bfloat16)

    attn = jnp.dot(p, v, preferred_element_type=jnp.float32).astype(jnp.bfloat16)
    x = x + jnp.dot(attn, wpack_ref[:, OFF_WO:OFF_WO + H],
                    preferred_element_type=jnp.float32)

    # ---- MLP ------------------------------------------------------------------
    h = _ln(x).astype(jnp.bfloat16)
    h1 = jnp.dot(h, wpack_ref[:, OFF_W1:OFF_W1 + F],
                 preferred_element_type=jnp.float32)       # (BS, F) f32
    h1 = h1 + aux_ref[ROW_1B:ROW_1B + 1, 0:F]
    h1 = jax.nn.gelu(h1).astype(jnp.bfloat16)
    # down-proj via w2^T, contracting the last axis of both operands.
    x = x + lax.dot_general(h1, wpack_ref[:, OFF_W2T:OFF_W2T + F],
                            (((1,), (1,)), ((), ())),
                            preferred_element_type=jnp.float32)

    # ---- final LN + LM head -> logits ------------------------------------------
    h = _ln(x).astype(jnp.bfloat16)
    logits = jnp.dot(h, wpack_ref[:, OFF_WLM:OFF_WLM + V],
                     preferred_element_type=jnp.float32)   # (BS, V)
    out_ref[...] = (logits + aux_ref[ROW_LB:ROW_LB + 1, 0:V]).astype(out_ref.dtype)


def _pad_cols(w, width=SEG):
    return jnp.pad(w, ((0, 0), (0, width - w.shape[1])))


def pack_params(params):
    """One-time packing (run at init, NOT per forward).

    Folds LN gammas + the attention scale into the weight rows (f32 fold, one
    bf16 cast), turns betas into post-matmul bias rows, builds the additive
    causal mask and pre-tiled positional table, and lays every weight segment
    on a 128-lane boundary.
    """
    inv_s = 1.0 / jnp.sqrt(jnp.float32(H))
    g1, b1 = params["ln1_g"], params["ln1_b"]
    g2, b2 = params["ln2_g"], params["ln2_b"]
    gf, bfin = params["lnf_g"], params["lnf_b"]

    # gamma (and score-scale) folds, done in f32
    wq = params["wq"] * g1.T * inv_s
    wk = params["wk"] * g1.T
    wv = params["wv"] * g1.T
    w1 = params["w1"] * g2.T
    wlm = params["wlm"] * gf.T

    # beta -> post-matmul bias rows (f32)
    q_bias = (b1 @ params["wq"]) * inv_s                   # (1, H)
    k_bias = b1 @ params["wk"]                             # (1, H)
    v_bias = b1 @ params["wv"]                             # (1, H)
    h1_bias = b2 @ params["w1"]                            # (1, F)
    logit_bias = bfin @ params["wlm"]                      # (1, V)

    wpack = jnp.concatenate(
        [wlm,                                              # cols   0:128
         _pad_cols(wq), _pad_cols(wk), _pad_cols(wv),      # cols 128:512
         _pad_cols(params["wo"]),                          # cols 512:640
         _pad_cols(w1),                                    # cols 640:768
         _pad_cols(params["w2"].T)],                       # cols 768:896
        axis=1).astype(jnp.bfloat16)                       # (H, 896)

    # block-diagonal causal mask over the fused (B*S, B*S) score matrix
    r = jnp.arange(BS)
    keep = (r[None, :] <= r[:, None]) & ((r[None, :] // S) == (r[:, None] // S))
    mask_bias = jnp.where(keep, 0.0, -1e30).astype(jnp.float32)       # (BS, BS)

    wpe_tiled = jnp.tile(params["wpe"], (B, 1)).astype(jnp.float32)   # (BS, H)

    aux = jnp.concatenate(
        [_pad_cols(mask_bias),                             # rows  0:16
         _pad_cols(wpe_tiled),                             # rows 16:32
         _pad_cols(logit_bias),                            # row  32
         _pad_cols(q_bias),                                # row  33
         _pad_cols(k_bias),                                # row  34
         _pad_cols(v_bias),                                # row  35
         _pad_cols(h1_bias),                               # row  36
         jnp.zeros((AUX_ROWS - 37, SEG), jnp.float32)],    # rows 37:40 (pad)
        axis=0)                                            # (40, 128) f32

    return {"wte": params["wte"].astype(jnp.bfloat16),     # (V, H) bf16
            "wpack": wpack, "aux": aux}


@jax.jit
def trace_wrapper_forward(input_ids, packed):
    """Equivalent of TraceWrapper(model)(input_ids) -> logits [B, S, V]."""
    b, s = input_ids.shape
    assert (b, s) == (B, S)
    ids = input_ids.reshape(BS, 1).astype(jnp.int32)

    vmem = pltpu.MemorySpace.VMEM
    logits = pl.pallas_call(
        lm_kernel,
        out_shape=jax.ShapeDtypeStruct((BS, V), jnp.float32),
        in_specs=[pl.BlockSpec(memory_space=vmem)] * 4,
        out_specs=pl.BlockSpec(memory_space=vmem),
    )(ids, packed["wte"], packed["wpack"], packed["aux"])
    return logits.reshape(B, S, V)


def init_params(key):
    ks = jax.random.split(key, 15)
    scale = 0.02
    n = lambda k, shape: scale * jax.random.normal(k, shape, jnp.float32)
    return {
        "wte": n(ks[0], (V, H)),
        "wpe": n(ks[1], (S, H)),
        "wq": n(ks[2], (H, H)),
        "wk": n(ks[3], (H, H)),
        "wv": n(ks[4], (H, H)),
        "wo": n(ks[5], (H, H)),
        "w1": n(ks[6], (H, F)),
        "w2": n(ks[7], (F, H)),
        "wlm": n(ks[8], (H, V)),
        "ln1_g": 1.0 + 0.1 * jax.random.normal(ks[9], (1, H), jnp.float32),
        "ln1_b": n(ks[10], (1, H)),
        "ln2_g": 1.0 + 0.1 * jax.random.normal(ks[11], (1, H), jnp.float32),
        "ln2_b": n(ks[12], (1, H)),
        "lnf_g": 1.0 + 0.1 * jax.random.normal(ks[13], (1, H), jnp.float32),
        "lnf_b": n(ks[14], (1, H)),
    }


def _reference(input_ids, params):
    """Pure-JAX reference with roughly matched precision (bf16 matmul operands,
    f32 accumulation; LN/softmax in f32). Uses the UNfolded weights."""
    bf16 = lambda a: a.astype(jnp.bfloat16)

    def ln(h, g, b):
        mu = jnp.mean(h, -1, keepdims=True)
        var = jnp.mean((h - mu) ** 2, -1, keepdims=True)
        return (h - mu) * lax.rsqrt(var + EPS) * g + b

    def mm(a, w):
        return jnp.dot(bf16(a), bf16(w), preferred_element_type=jnp.float32)

    x = jnp.take(params["wte"], input_ids, axis=0) + params["wpe"][None]
    x = x.astype(jnp.float32)

    h = ln(x, params["ln1_g"], params["ln1_b"])
    q = mm(h, params["wq"]); k = mm(h, params["wk"]); v = mm(h, params["wv"])
    sc = jnp.einsum("bqh,bkh->bqk", bf16(q), bf16(k),
                    preferred_element_type=jnp.float32) / jnp.sqrt(jnp.float32(H))
    causal = jnp.tril(jnp.ones((S, S), bool))
    sc = jnp.where(causal[None], sc, -1e30)
    p = jax.nn.softmax(sc, -1)
    attn = jnp.einsum("bqk,bkh->bqh", bf16(p), bf16(v),
                      preferred_element_type=jnp.float32)
    x = x + mm(attn, params["wo"])

    h = ln(x, params["ln2_g"], params["ln2_b"])
    x = x + mm(jax.nn.gelu(mm(h, params["w1"])), params["w2"])

    h = ln(x, params["lnf_g"], params["lnf_b"])
    return mm(h, params["wlm"])


if __name__ == "__main__":
    key = jax.random.PRNGKey(0)
    k_param, k_ids = jax.random.split(key)
    params = init_params(k_param)
    input_ids = jax.random.randint(k_ids, (B, S), 0, V, dtype=jnp.int32)

    # one-time packing, outside the per-call hot path
    packed = jax.block_until_ready(pack_params(params))

    logits = trace_wrapper_forward(input_ids, packed)
    logits = jax.block_until_ready(logits)

    ref = _reference(input_ids, params)
    assert logits.shape == (B, S, V)
    # bf16 operands + gamma/scale folds + approx reciprocal -> loosened tolerance
    err = float(jnp.max(jnp.abs(logits - ref)))
    assert jnp.allclose(logits, ref, atol=1e-2, rtol=5e-2), err
    print("KERNEL_OK")
</pallas_src>

<mosaic_0001>
module attributes {stable_mosaic.version = 11 : i64} {
  func.func @lm_kernel(%arg0: memref<16x1xi32, #tpu.memory_space<vmem>>, %arg1: memref<128x32xbf16, #tpu.memory_space<vmem>>, %arg2: memref<32x896xbf16, #tpu.memory_space<vmem>>, %arg3: memref<40x128xf32, #tpu.memory_space<vmem>>, %arg4: memref<16x128xf32, #tpu.memory_space<vmem>>) attributes {dimension_semantics = [], scalar_prefetch = 0 : i64, scratch_operands = 0 : i64, tpu.core_type = #tpu.core_type<tc>} {
    %c0 = arith.constant 0 : index
    %c0_0 = arith.constant 0 : index
    %0 = vector.load %arg0[%c0, %c0_0] : memref<16x1xi32, #tpu.memory_space<vmem>>, vector<16x1xi32>
    %1 = tpu.iota {dimensions = array<i32: 1>} : vector<16x128xi32>
    %2 = vector.broadcast %0 : vector<16x1xi32> to vector<16x128xi32>
    %3 = arith.cmpi eq, %2, %1 : vector<16x128xi32>
    %4 = arith.extui %3 : vector<16x128xi1> to vector<16x128xi32>
    %5 = arith.sitofp %4 : vector<16x128xi32> to vector<16x128xf32>
    %6 = arith.truncf %5 : vector<16x128xf32> to vector<16x128xbf16>
    %c0_1 = arith.constant 0 : index
    %c0_2 = arith.constant 0 : index
    %7 = vector.load %arg1[%c0_1, %c0_2] : memref<128x32xbf16, #tpu.memory_space<vmem>>, vector<128x32xbf16>
    %cst = arith.constant dense<0.000000e+00> : vector<16x32xf32>
    %8 = tpu.matmul %6, %7, %cst {dimension_numbers = #tpu.dot_dimension_numbers<[1], [0], [0], [1], [0, 0, 1, 1], [], []>} : vector<16x128xbf16>, vector<128x32xbf16>, vector<16x32xf32> -> vector<16x32xf32>
    %c16 = arith.constant 16 : index
    %c0_3 = arith.constant 0 : index
    %9 = vector.load %arg3[%c16, %c0_3] : memref<40x128xf32, #tpu.memory_space<vmem>>, vector<16x32xf32>
    %10 = arith.addf %8, %9 : vector<16x32xf32>
    %cst_4 = arith.constant dense<0.000000e+00> : vector<16xf32>
    %11 = vector.multi_reduction <add>, %10, %cst_4 [1] : vector<16x32xf32> to vector<16xf32>
    %12 = vector.shape_cast %11 : vector<16xf32> to vector<16x1xf32>
    %cst_5 = arith.constant 3.200000e+01 : f32
    %13 = vector.broadcast %cst_5 : f32 to vector<16x1xf32>
    %14 = arith.divf %12, %13 : vector<16x1xf32>
    %15 = vector.broadcast %14 : vector<16x1xf32> to vector<16x32xf32>
    %16 = arith.subf %10, %15 : vector<16x32xf32>
    %17 = vector.broadcast %14 : vector<16x1xf32> to vector<16x32xf32>
    %18 = arith.subf %10, %17 : vector<16x32xf32>
    %19 = arith.mulf %16, %18 : vector<16x32xf32>
    %cst_6 = arith.constant dense<0.000000e+00> : vector<16xf32>
    %20 = vector.multi_reduction <add>, %19, %cst_6 [1] : vector<16x32xf32> to vector<16xf32>
    %21 = vector.shape_cast %20 : vector<16xf32> to vector<16x1xf32>
    %cst_7 = arith.constant 3.200000e+01 : f32
    %22 = vector.broadcast %cst_7 : f32 to vector<16x1xf32>
    %23 = arith.divf %21, %22 : vector<16x1xf32>
    %24 = vector.broadcast %14 : vector<16x1xf32> to vector<16x32xf32>
    %25 = arith.subf %10, %24 : vector<16x32xf32>
    %cst_8 = arith.constant 9.99999974E-6 : f32
    %26 = vector.broadcast %cst_8 : f32 to vector<16x1xf32>
    %27 = arith.addf %23, %26 : vector<16x1xf32>
    %28 = math.rsqrt %27 : vector<16x1xf32>
    %29 = vector.broadcast %28 : vector<16x1xf32> to vector<16x32xf32>
    %30 = arith.mulf %25, %29 : vector<16x32xf32>
    %31 = arith.truncf %30 : vector<16x32xf32> to vector<16x32xbf16>
    %c0_9 = arith.constant 0 : index
    %c128 = arith.constant 128 : index
    %32 = vector.load %arg2[%c0_9, %c128] : memref<32x896xbf16, #tpu.memory_space<vmem>>, vector<32x384xbf16>
    %cst_10 = arith.constant dense<0.000000e+00> : vector<16x384xf32>
    %33 = tpu.matmul %31, %32, %cst_10 {dimension_numbers = #tpu.dot_dimension_numbers<[1], [0], [0], [1], [0, 0, 1, 1], [], []>} : vector<16x32xbf16>, vector<32x384xbf16>, vector<16x384xf32> -> vector<16x384xf32>
    %34 = vector.extract_strided_slice %33 {offsets = [0, 0], sizes = [16, 32], strides = [1, 1]} : vector<16x384xf32> to vector<16x32xf32>
    %c33 = arith.constant 33 : index
    %c0_11 = arith.constant 0 : index
    %35 = vector.load %arg3[%c33, %c0_11] : memref<40x128xf32, #tpu.memory_space<vmem>>, vector<1x32xf32>
    %36 = vector.broadcast %35 : vector<1x32xf32> to vector<16x32xf32>
    %37 = arith.addf %34, %36 : vector<16x32xf32>
    %38 = arith.truncf %37 : vector<16x32xf32> to vector<16x32xbf16>
    %39 = vector.extract_strided_slice %33 {offsets = [0, 128], sizes = [16, 32], strides = [1, 1]} : vector<16x384xf32> to vector<16x32xf32>
    %c34 = arith.constant 34 : index
    %c0_12 = arith.constant 0 : index
    %40 = vector.load %arg3[%c34, %c0_12] : memref<40x128xf32, #tpu.memory_space<vmem>>, vector<1x32xf32>
    %41 = vector.broadcast %40 : vector<1x32xf32> to vector<16x32xf32>
    %42 = arith.addf %39, %41 : vector<16x32xf32>
    %43 = arith.truncf %42 : vector<16x32xf32> to vector<16x32xbf16>
    %44 = vector.extract_strided_slice %33 {offsets = [0, 256], sizes = [16, 32], strides = [1, 1]} : vector<16x384xf32> to vector<16x32xf32>
    %c35 = arith.constant 35 : index
    %c0_13 = arith.constant 0 : index
    %45 = vector.load %arg3[%c35, %c0_13] : memref<40x128xf32, #tpu.memory_space<vmem>>, vector<1x32xf32>
    %46 = vector.broadcast %45 : vector<1x32xf32> to vector<16x32xf32>
    %47 = arith.addf %44, %46 : vector<16x32xf32>
    %48 = arith.truncf %47 : vector<16x32xf32> to vector<16x32xbf16>
    %cst_14 = arith.constant dense<0.000000e+00> : vector<16x16xf32>
    %49 = tpu.matmul %38, %43, %cst_14 {dimension_numbers = #tpu.dot_dimension_numbers<[1], [1], [0], [0], [0, 0, 1, 0], [], []>} : vector<16x32xbf16>, vector<16x32xbf16>, vector<16x16xf32> -> vector<16x16xf32>
    %c0_15 = arith.constant 0 : index
    %c0_16 = arith.constant 0 : index
    %50 = vector.load %arg3[%c0_15, %c0_16] : memref<40x128xf32, #tpu.memory_space<vmem>>, vector<16x16xf32>
    %51 = arith.addf %49, %50 : vector<16x16xf32>
    %cst_17 = arith.constant dense<0xFF800000> : vector<16xf32>
    %52 = vector.multi_reduction <maximumf>, %51, %cst_17 [1] : vector<16x16xf32> to vector<16xf32>
    %53 = vector.shape_cast %52 : vector<16xf32> to vector<16x1xf32>
    %54 = vector.broadcast %53 : vector<16x1xf32> to vector<16x16xf32>
    %55 = arith.subf %51, %54 : vector<16x16xf32>
    %56 = math.exp %55 : vector<16x16xf32>
    %cst_18 = arith.constant dense<0.000000e+00> : vector<16xf32>
    %57 = vector.multi_reduction <add>, %56, %cst_18 [1] : vector<16x16xf32> to vector<16xf32>
    %58 = vector.shape_cast %57 : vector<16xf32> to vector<16x1xf32>
    %59 = tpu.reciprocal %58 {approx = true} : vector<16x1xf32> -> vector<16x1xf32>
    %60 = vector.broadcast %59 : vector<16x1xf32> to vector<16x16xf32>
    %61 = arith.mulf %56, %60 : vector<16x16xf32>
    %62 = arith.truncf %61 : vector<16x16xf32> to vector<16x16xbf16>
    %cst_19 = arith.constant dense<0.000000e+00> : vector<16x32xf32>
    %63 = tpu.matmul %62, %48, %cst_19 {dimension_numbers = #tpu.dot_dimension_numbers<[1], [0], [0], [1], [0, 0, 1, 1], [], []>} : vector<16x16xbf16>, vector<16x32xbf16>, vector<16x32xf32> -> vector<16x32xf32>
    %64 = arith.truncf %63 : vector<16x32xf32> to vector<16x32xbf16>
    %c0_20 = arith.constant 0 : index
    %c512 = arith.constant 512 : index
    %65 = vector.load %arg2[%c0_20, %c512] : memref<32x896xbf16, #tpu.memory_space<vmem>>, vector<32x32xbf16>
    %cst_21 = arith.constant dense<0.000000e+00> : vector<16x32xf32>
    %66 = tpu.matmul %64, %65, %cst_21 {dimension_numbers = #tpu.dot_dimension_numbers<[1], [0], [0], [1], [0, 0, 1, 1], [], []>} : vector<16x32xbf16>, vector<32x32xbf16>, vector<16x32xf32> -> vector<16x32xf32>
    %67 = arith.addf %10, %66 : vector<16x32xf32>
    %cst_22 = arith.constant dense<0.000000e+00> : vector<16xf32>
    %68 = vector.multi_reduction <add>, %67, %cst_22 [1] : vector<16x32xf32> to vector<16xf32>
    %69 = vector.shape_cast %68 : vector<16xf32> to vector<16x1xf32>
    %cst_23 = arith.constant 3.200000e+01 : f32
    %70 = vector.broadcast %cst_23 : f32 to vector<16x1xf32>
    %71 = arith.divf %69, %70 : vector<16x1xf32>
    %72 = vector.broadcast %71 : vector<16x1xf32> to vector<16x32xf32>
    %73 = arith.subf %67, %72 : vector<16x32xf32>
    %74 = vector.broadcast %71 : vector<16x1xf32> to vector<16x32xf32>
    %75 = arith.subf %67, %74 : vector<16x32xf32>
    %76 = arith.mulf %73, %75 : vector<16x32xf32>
    %cst_24 = arith.constant dense<0.000000e+00> : vector<16xf32>
    %77 = vector.multi_reduction <add>, %76, %cst_24 [1] : vector<16x32xf32> to vector<16xf32>
    %78 = vector.shape_cast %77 : vector<16xf32> to vector<16x1xf32>
    %cst_25 = arith.constant 3.200000e+01 : f32
    %79 = vector.broadcast %cst_25 : f32 to vector<16x1xf32>
    %80 = arith.divf %78, %79 : vector<16x1xf32>
    %81 = vector.broadcast %71 : vector<16x1xf32> to vector<16x32xf32>
    %82 = arith.subf %67, %81 : vector<16x32xf32>
    %cst_26 = arith.constant 9.99999974E-6 : f32
    %83 = vector.broadcast %cst_26 : f32 to vector<16x1xf32>
    %84 = arith.addf %80, %83 : vector<16x1xf32>
    %85 = math.rsqrt %84 : vector<16x1xf32>
    %86 = vector.broadcast %85 : vector<16x1xf32> to vector<16x32xf32>
    %87 = arith.mulf %82, %86 : vector<16x32xf32>
    %88 = arith.truncf %87 : vector<16x32xf32> to vector<16x32xbf16>
    %c0_27 = arith.constant 0 : index
    %c640 = arith.constant 640 : index
    %89 = vector.load %arg2[%c0_27, %c640] : memref<32x896xbf16, #tpu.memory_space<vmem>>, vector<32x64xbf16>
    %cst_28 = arith.constant dense<0.000000e+00> : vector<16x64xf32>
    %90 = tpu.matmul %88, %89, %cst_28 {dimension_numbers = #tpu.dot_dimension_numbers<[1], [0], [0], [1], [0, 0, 1, 1], [], []>} : vector<16x32xbf16>, vector<32x64xbf16>, vector<16x64xf32> -> vector<16x64xf32>
    %c36 = arith.constant 36 : index
    %c0_29 = arith.constant 0 : index
    %91 = vector.load %arg3[%c36, %c0_29] : memref<40x128xf32, #tpu.memory_space<vmem>>, vector<1x64xf32>
    %92 = vector.broadcast %91 : vector<1x64xf32> to vector<16x64xf32>
    %93 = arith.addf %90, %92 : vector<16x64xf32>
    %94 = arith.mulf %93, %93 : vector<16x64xf32>
    %95 = arith.mulf %93, %94 : vector<16x64xf32>
    %cst_30 = arith.constant 4.471500e-02 : f32
    %96 = vector.broadcast %cst_30 : f32 to vector<16x64xf32>
    %97 = arith.mulf %96, %95 : vector<16x64xf32>
    %98 = arith.addf %93, %97 : vector<16x64xf32>
    %cst_31 = arith.constant 0.797884583 : f32
    %99 = vector.broadcast %cst_31 : f32 to vector<16x64xf32>
    %100 = arith.mulf %99, %98 : vector<16x64xf32>
    %101 = math.tanh %100 : vector<16x64xf32>
    %cst_32 = arith.constant 1.000000e+00 : f32
    %102 = vector.broadcast %cst_32 : f32 to vector<16x64xf32>
    %103 = arith.addf %102, %101 : vector<16x64xf32>
    %cst_33 = arith.constant 5.000000e-01 : f32
    %104 = vector.broadcast %cst_33 : f32 to vector<16x64xf32>
    %105 = arith.mulf %104, %103 : vector<16x64xf32>
    %106 = arith.mulf %93, %105 : vector<16x64xf32>
    %107 = arith.truncf %106 : vector<16x64xf32> to vector<16x64xbf16>
    %c0_34 = arith.constant 0 : index
    %c768 = arith.constant 768 : index
    %108 = vector.load %arg2[%c0_34, %c768] : memref<32x896xbf16, #tpu.memory_space<vmem>>, vector<32x64xbf16>
    %cst_35 = arith.constant dense<0.000000e+00> : vector<16x32xf32>
    %109 = tpu.matmul %107, %108, %cst_35 {dimension_numbers = #tpu.dot_dimension_numbers<[1], [1], [0], [0], [0, 0, 1, 0], [], []>} : vector<16x64xbf16>, vector<32x64xbf16>, vector<16x32xf32> -> vector<16x32xf32>
    %110 = arith.addf %67, %109 : vector<16x32xf32>
    %cst_36 = arith.constant dense<0.000000e+00> : vector<16xf32>
    %111 = vector.multi_reduction <add>, %110, %cst_36 [1] : vector<16x32xf32> to vector<16xf32>
    %112 = vector.shape_cast %111 : vector<16xf32> to vector<16x1xf32>
    %cst_37 = arith.constant 3.200000e+01 : f32
    %113 = vector.broadcast %cst_37 : f32 to vector<16x1xf32>
    %114 = arith.divf %112, %113 : vector<16x1xf32>
    %115 = vector.broadcast %114 : vector<16x1xf32> to vector<16x32xf32>
    %116 = arith.subf %110, %115 : vector<16x32xf32>
    %117 = vector.broadcast %114 : vector<16x1xf32> to vector<16x32xf32>
    %118 = arith.subf %110, %117 : vector<16x32xf32>
    %119 = arith.mulf %116, %118 : vector<16x32xf32>
    %cst_38 = arith.constant dense<0.000000e+00> : vector<16xf32>
    %120 = vector.multi_reduction <add>, %119, %cst_38 [1] : vector<16x32xf32> to vector<16xf32>
    %121 = vector.shape_cast %120 : vector<16xf32> to vector<16x1xf32>
    %cst_39 = arith.constant 3.200000e+01 : f32
    %122 = vector.broadcast %cst_39 : f32 to vector<16x1xf32>
    %123 = arith.divf %121, %122 : vector<16x1xf32>
    %124 = vector.broadcast %114 : vector<16x1xf32> to vector<16x32xf32>
    %125 = arith.subf %110, %124 : vector<16x32xf32>
    %cst_40 = arith.constant 9.99999974E-6 : f32
    %126 = vector.broadcast %cst_40 : f32 to vector<16x1xf32>
    %127 = arith.addf %123, %126 : vector<16x1xf32>
    %128 = math.rsqrt %127 : vector<16x1xf32>
    %129 = vector.broadcast %128 : vector<16x1xf32> to vector<16x32xf32>
    %130 = arith.mulf %125, %129 : vector<16x32xf32>
    %131 = arith.truncf %130 : vector<16x32xf32> to vector<16x32xbf16>
    %c0_41 = arith.constant 0 : index
    %c0_42 = arith.constant 0 : index
    %132 = vector.load %arg2[%c0_41, %c0_42] : memref<32x896xbf16, #tpu.memory_space<vmem>>, vector<32x128xbf16>
    %cst_43 = arith.constant dense<0.000000e+00> : vector<16x128xf32>
    %133 = tpu.matmul %131, %132, %cst_43 {dimension_numbers = #tpu.dot_dimension_numbers<[1], [0], [0], [1], [0, 0, 1, 1], [], []>} : vector<16x32xbf16>, vector<32x128xbf16>, vector<16x128xf32> -> vector<16x128xf32>
    %c32 = arith.constant 32 : index
    %c0_44 = arith.constant 0 : index
    %134 = vector.load %arg3[%c32, %c0_44] : memref<40x128xf32, #tpu.memory_space<vmem>>, vector<1x128xf32>
    %135 = vector.broadcast %134 : vector<1x128xf32> to vector<16x128xf32>
    %136 = arith.addf %133, %135 : vector<16x128xf32>
    %c0_45 = arith.constant 0 : index
    %c0_46 = arith.constant 0 : index
    %137 = vector.load %arg4[%c0_45, %c0_46] : memref<16x128xf32, #tpu.memory_space<vmem>>, vector<16x128xf32>
    tpu.vector_store %arg4[%c0_45, %c0_46], %136 {strides = array<i32>} : memref<16x128xf32, #tpu.memory_space<vmem>>, vector<16x128xf32>,
    return
  }
}

</mosaic_0001>

<llo_original>
// kernel: trace_wrapper_forward.1
$region0: #{trace_wrapper_forward.1}
  #allocation0 [shape = 'u32[]', space=smem, size = 0x4, offset = 0x4, fixed_abs, tag = 'smem constant byte address 0x4 - core index']
  #allocation1 [shape = 'u32[144,128]{1,0:T(1,128)}', space=vmem, size = 0x12000, scoped, tag = 'internal scratch']
  %s0 = inlined_call_operand.vmem [shape: s32[16,1], index: 0, kind: input, shape index: {}]
  %s1 = inlined_call_operand.vmem [shape: bf16[128,32], index: 1, kind: input, shape index: {}]
  %s2 = inlined_call_operand.hbm [shape: bf16[32,896], index: 2, kind: input, shape index: {}]
  %s3 = inlined_call_operand.vmem [shape: f32[40,128], index: 3, kind: input, shape index: {}]
  %s4 = inlined_call_operand.hbm [shape: f32[16,128], index: 4, kind: output, shape index: {}]
  %s5 = sld [smem:[#allocation0]]
  $region30: #{trace_wrapper_forward.1} parent=0
    _
  %s7 = ssub.s32 1, %s5
  %s8 = scalar_select 0, %s7, %s5
  $region1: #{trace_wrapper_forward.1} parent=0
    #allocation2 [shape = 'u8[57344]{0}', space=vmem, size = 0xe000, scoped, tag = 'input window, operand 2, single buffered']
    #allocation3 [shape = 's32[1]{0}', space=sflag, size = 0x4, scoped, tag = 'scoped memory for trace_wrapper_forward.1']
    #allocation4 [shape = 's32[1]{0}', space=sflag, size = 0x4, scoped, tag = 'scoped memory for trace_wrapper_forward.1']
    #allocation5 [shape = 'u8[8192]{0}', space=vmem, size = 0x2000, scoped, tag = 'output window, operand 0, single buffered']
    %9 = vsyncpa [#allocation3], 0
    %10 = vsyncpa [#allocation4], 0
    // Predicated region
    $region2: #{trace_wrapper_forward.1} parent=1 // pred_check
      _
    $region3: #{trace_wrapper_forward.1} parent=1 // pred_check_branch
      %12 = sbr.rel (0) target = $region5
    $region4: #{trace_wrapper_forward.1} parent=1 // pred_region
      _
    $region5: #{trace_wrapper_forward.1} parent=1 // pred_fallthru
      _
    // Predicated region
    $region6: #{trace_wrapper_forward.1} parent=1 // pred_check
      _
    $region7: #{trace_wrapper_forward.1} parent=1 // pred_check_branch
      %14 = sbr.rel (0) target = $region9
    $region8: #{trace_wrapper_forward.1} parent=1 // pred_region
      _
    $region9: #{trace_wrapper_forward.1} parent=1 // pred_fallthru
      _
    // Predicated region
    $region10: #{trace_wrapper_forward.1} parent=1 // pred_check
      _
    $region11: #{trace_wrapper_forward.1} parent=1 // pred_check_branch
      %16 = sbr.rel (0) target = $region13
    $region12: #{trace_wrapper_forward.1} parent=1 // pred_region
      %s18 = ssub.s32 1792, 1792
      %19 = vsyncadd [#allocation3], %s18
      %s20 = sshll.u32 [#allocation2], 4
      %s21 = int_to_ptr.vmem [resolvable:$true] %s20
      %26 = dma.hbm_to_vmem [thread:$0]  %s2, 1792, %s21, [#allocation3], 448, 448, 28
    $region13: #{trace_wrapper_forward.1} parent=1 // pred_fallthru
      _
    // Predicated region
    $region14: #{trace_wrapper_forward.1} parent=1 // pred_check
      _
    $region15: #{trace_wrapper_forward.1} parent=1 // pred_check_branch
      %28 = sbr.rel (0) target = $region17
    $region16: #{trace_wrapper_forward.1} parent=1 // pred_region
      _
    $region17: #{trace_wrapper_forward.1} parent=1 // pred_fallthru
      _
    // Predicated region
    $region18: #{trace_wrapper_forward.1} parent=1 // pred_check
      _
    $region19: #{trace_wrapper_forward.1} parent=1 // pred_check_branch
      %30 = sbr.rel (0) target = $region21
    $region20: #{trace_wrapper_forward.1} parent=1 // pred_region
      %31 = dma.done [#allocation3], 1792
    $region21: #{trace_wrapper_forward.1} parent=1 // pred_fallthru
      _
    %v33 = vld [vmem:[%s0] sm:$0xff]
    %v34 = vld [vmem:[%s0 + $0x8] sm:$0xff]
    %v35 = vlaneseq
    %v36 = vand.u32 %v35, 127
    %37 = vset.pattern.permute.xlu0 0
    %38 = vperm.xlu0 %37, %v33
    %v39 = vpop.permute.xlu0 %38
    %40 = vset.pattern.permute.xlu0 0
    %41 = vperm.xlu0 %40, %v34
    %v42 = vpop.permute.xlu0 %41
    %vm43 = vcmp.eq.s32.totalorder %v39, %v36
    %vm44 = vcmp.eq.s32.totalorder %v42, %v36
    %v45 = vsel %vm43, 1, 0
    %v46 = vsel %vm44, 1, 0
    %v47 = vcvt.s32.f32 %v45
    %v48 = vcvt.s32.f32 %v46
    %v49 = vpack.c.bf16 %v48, %v47
    %v50 = vld [vmem:[%s1] sm:$0xf]
    %v51 = vld [vmem:[%s1 + $0x4] sm:$0xf]
    %v52 = vld [vmem:[%s1 + $0x8] sm:$0xf]
    %v53 = vld [vmem:[%s1 + $0xc] sm:$0xf]
    %v54 = vld [vmem:[%s1 + $0x10] sm:$0xf]
    %v55 = vld [vmem:[%s1 + $0x14] sm:$0xf]
    %v56 = vld [vmem:[%s1 + $0x18] sm:$0xf]
    %v57 = vld [vmem:[%s1 + $0x1c] sm:$0xf]
    %v58 = vld [vmem:[%s1 + $0x20] sm:$0xf]
    %v59 = vld [vmem:[%s1 + $0x24] sm:$0xf]
    %v60 = vld [vmem:[%s1 + $0x28] sm:$0xf]
    %v61 = vld [vmem:[%s1 + $0x2c] sm:$0xf]
    %v62 = vld [vmem:[%s1 + $0x30] sm:$0xf]
    %v63 = vld [vmem:[%s1 + $0x34] sm:$0xf]
    %v64 = vld [vmem:[%s1 + $0x38] sm:$0xf]
    %v65 = vld [vmem:[%s1 + $0x3c] sm:$0xf]
    %v66 = vld [vmem:[%s3 + $0x10] sm:$0xff]
    %v67 = vld [vmem:[%s3 + $0x18] sm:$0xff]
    %v84 = vunpack.c.l.b16 %v50
    %v85 = vunpack.c.l.b16 %v51
    %v86 = vunpack.c.l.b16 %v52
    %v87 = vunpack.c.l.b16 %v53
    %v88 = vunpack.c.l.b16 %v54
    %v89 = vunpack.c.l.b16 %v55
    %v90 = vunpack.c.l.b16 %v56
    %v91 = vunpack.c.l.b16 %v57
    %v92 = vunpack.c.l.b16 %v58
    %v93 = vunpack.c.l.b16 %v59
    %v94 = vunpack.c.l.b16 %v60
    %v95 = vunpack.c.l.b16 %v61
    %v96 = vunpack.c.l.b16 %v62
    %v97 = vunpack.c.l.b16 %v63
    %v98 = vunpack.c.l.b16 %v64
    %v99 = vunpack.c.l.b16 %v65
    %v100 = vpack.c.b16 %v85, %v84
    %v101 = vpack.c.b16 %v87, %v86
    %v102 = vpack.c.b16 %v89, %v88
    %v103 = vpack.c.b16 %v91, %v90
    %v104 = vpack.c.b16 %v93, %v92
    %v105 = vpack.c.b16 %v95, %v94
    %v106 = vpack.c.b16 %v97, %v96
    %v107 = vpack.c.b16 %v99, %v98
    %116 = vmatprep.subr.bf16.mxu0 0
    %117 = vmatpush1.bf16.msra.mxu0 %v100
    %118 = vmatprep.subr.bf16.mxu0 0
    %119 = vmatpush1.bf16.msra.mxu0 %v101
    %120 = vmatprep.subr.bf16.mxu0 0
    %121 = vmatpush1.bf16.msra.mxu0 %v102
    %122 = vmatprep.subr.bf16.mxu0 0
    %123 = vmatpush1.bf16.msra.mxu0 %v103
    %124 = vmatprep.subr.bf16.mxu0 0
    %125 = vmatpush1.bf16.msra.mxu0 %v104
    %126 = vmatprep.subr.bf16.mxu0 0
    %127 = vmatpush1.bf16.msra.mxu0 %v105
    %128 = vmatprep.subr.bf16.mxu0 0
    %129 = vmatpush1.bf16.msra.mxu0 %v106
    %130 = vmatprep.subr.bf16.mxu0 0
    %131 = vmatpush1.bf16.msra.mxu0 %v107
    %132 = vmatprep.subr.bf16.mxu0 0
    %133 = vmatpush1.bf16.msra.mxu0 0
    %134 = vmatprep.subr.bf16.mxu0 0
    %135 = vmatpush1.bf16.msra.mxu0 0
    %136 = vmatprep.subr.bf16.mxu0 0
    %137 = vmatpush1.bf16.msra.mxu0 0
    %138 = vmatprep.subr.bf16.mxu0 0
    %139 = vmatpush1.bf16.msra.mxu0 0
    %140 = vmatprep.subr.bf16.mxu0 0
    %141 = vmatpush1.bf16.msra.mxu0 0
    %142 = vmatprep.subr.bf16.mxu0 0
    %143 = vmatpush1.bf16.msra.mxu0 0
    %144 = vmatprep.subr.bf16.mxu0 0
    %145 = vmatpush1.bf16.msra.mxu0 0
    %146 = vmatprep.subr.bf16.mxu0 0
    %147 = vmatpush1.bf16.msra.mxu0 0
    %148 = vmatprep.mubr.bf16.mxu0 0
    %149 = vmatmul.mubr.bf16.gmra.mrb[0].mxu0 %v49
    %v150 = vpop.f32.mrb[0].mxu0
    %v151 = vadd.f32 %v66, %v150
    %v152 = vpop.f32.mrb[0].mxu0
    %v153 = vpop.f32.mrb[0].mxu0
    %v154 = vadd.f32 %v67, %v153
    %v155 = vpop.f32.mrb[0].mxu0
    %156 = vdwg.mxu0
    %vm157 = vcmask 261120
    %v158 = vsel %vm157, %v151, 0.0
    %159 = vadd.xlane.f32.xlu0 %v158
    %v160 = vpop.xlane.xlu0 %159
    %v161 = vsel %vm157, %v154, 0.0
    %162 = vadd.xlane.f32.xlu0 %v161
    %v163 = vpop.xlane.xlu0 %162
    %v164 = vrcp.pop 32.0
    %v165 = vmul.f32 %v160, %v164
    %v166 = vmul.f32 %v163, %v164
    %v167 = vsub.f32 %v151, %v165
    %v168 = vsub.f32 %v154, %v166
    %v169 = vmul.f32 %v167, %v167
    %v170 = vmul.f32 %v168, %v168
    %v171 = vsel %vm157, %v169, 0.0
    %172 = vadd.xlane.f32.xlu0 %v171
    %v173 = vpop.xlane.xlu0 %172
    %v174 = vsel %vm157, %v170, 0.0
    %175 = vadd.xlane.f32.xlu0 %v174
    %v176 = vpop.xlane.xlu0 %175
    %v177 = vmul.f32 %v173, %v164
    %v178 = vmul.f32 %v176, %v164
    %v179 = vadd.f32 %v177, 1e-05
    %v180 = vadd.f32 %v178, 1e-05
    %v181 = vrsqrt.pop %v179
    %v182 = vrsqrt.pop %v180
    %v183 = vmul.f32 %v167, %v181
    %v184 = vmul.f32 %v168, %v182
    %v185 = vpack.c.bf16 %v184, %v183
    %v186 = vld [vmem:[#allocation2 + $0x4] sm:$0xff]
    %v187 = vld [vmem:[#allocation2 + $0xc] sm:$0xf]
    %v188 = vld [vmem:[#allocation2 + $0x20] sm:$0xff]
    %v189 = vld [vmem:[#allocation2 + $0x28] sm:$0xf]
    %v190 = vld [vmem:[#allocation2 + $0x3c] sm:$0xff]
    %v191 = vld [vmem:[#allocation2 + $0x44] sm:$0xf]
    %v192 = vld [vmem:[#allocation2 + $0x58] sm:$0xff]
    %v193 = vld [vmem:[#allocation2 + $0x60] sm:$0xf]
    %v202 = vunpack.c.l.b16 %v186
    %v203 = vunpack.c.h.b16 %v186
    %v204 = vunpack.c.l.b16 %v187
    %v205 = vunpack.c.l.b16 %v188
    %v206 = vunpack.c.h.b16 %v188
    %v207 = vunpack.c.l.b16 %v189
    %v208 = vunpack.c.l.b16 %v190
    %v209 = vunpack.c.h.b16 %v190
    %v210 = vunpack.c.l.b16 %v191
    %v211 = vunpack.c.l.b16 %v192
    %v212 = vunpack.c.h.b16 %v192
    %v213 = vunpack.c.l.b16 %v193
    %v214 = vpack.c.b16 %v205, %v202
    %v215 = vpack.c.b16 %v206, %v203
    %v216 = vpack.c.b16 %v207, %v204
    %v217 = vpack.c.b16 %v211, %v208
    %v218 = vpack.c.b16 %v212, %v209
    %v219 = vpack.c.b16 %v213, %v210
    %v227 = vsel %vm157, %v185, 0
    %229 = vmatprep.subr.bf16.mxu0 %v215
    %230 = vmatpush1.bf16.msra.mxu0 %v214
    %231 = vmatprep.subr.bf16.mxu0 %v218
    %232 = vmatpush1.bf16.msra.mxu0 %v217
    %233 = vmatprep.subr.bf16.mxu0 0
    %234 = vmatpush1.bf16.msra.mxu0 0
    %235 = vmatprep.subr.bf16.mxu0 0
    %236 = vmatpush1.bf16.msra.mxu0 0
    %237 = vmatprep.subr.bf16.mxu0 0
    %238 = vmatpush1.bf16.msra.mxu0 0
    %239 = vmatprep.subr.bf16.mxu0 0
    %240 = vmatpush1.bf16.msra.mxu0 0
    %241 = vmatprep.subr.bf16.mxu0 0
    %242 = vmatpush1.bf16.msra.mxu0 0
    %243 = vmatprep.subr.bf16.mxu0 0
    %244 = vmatpush1.bf16.msra.mxu0 0
    %245 = vmatprep.subr.bf16.mxu0 0
    %246 = vmatpush1.bf16.msra.mxu0 0
    %247 = vmatprep.subr.bf16.mxu0 0
    %248 = vmatpush1.bf16.msra.mxu0 0
    %249 = vmatprep.subr.bf16.mxu0 0
    %250 = vmatpush1.bf16.msra.mxu0 0
    %251 = vmatprep.subr.bf16.mxu0 0
    %252 = vmatpush1.bf16.msra.mxu0 0
    %253 = vmatprep.subr.bf16.mxu0 0
    %254 = vmatpush1.bf16.msra.mxu0 0
    %255 = vmatprep.subr.bf16.mxu0 0
    %256 = vmatpush1.bf16.msra.mxu0 0
    %257 = vmatprep.subr.bf16.mxu0 0
    %258 = vmatpush1.bf16.msra.mxu0 0
    %259 = vmatprep.subr.bf16.mxu0 0
    %260 = vmatpush1.bf16.msra.mxu0 0
    %261 = vmatprep.mubr.bf16.mxu0 0
    %262 = vmatmul.mubr.bf16.gmra.mrb[0].mxu0 %v227
    %v263 = vpop.f32.mrb[0].mxu0
    %v264 = vadd.f32 0.0, %v263
    %v265 = vpop.f32.mrb[0].mxu0
    %v266 = vadd.f32 0.0, %v265
    %v267 = vpop.f32.mrb[0].mxu0
    %v268 = vadd.f32 0.0, %v267
    %v269 = vpop.f32.mrb[0].mxu0
    %v270 = vadd.f32 0.0, %v269
    %271 = vdwg.mxu0
    %272 = vmatprep.subr.bf16.mxu0 0
    %273 = vmatpush1.bf16.msra.mxu0 %v216
    %274 = vmatprep.subr.bf16.mxu0 0
    %275 = vmatpush1.bf16.msra.mxu0 %v219
    %276 = vmatprep.subr.bf16.mxu0 0
    %277 = vmatpush1.bf16.msra.mxu0 0
    %278 = vmatprep.subr.bf16.mxu0 0
    %279 = vmatpush1.bf16.msra.mxu0 0
    %280 = vmatprep.subr.bf16.mxu0 0
    %281 = vmatpush1.bf16.msra.mxu0 0
    %282 = vmatprep.subr.bf16.mxu0 0
    %283 = vmatpush1.bf16.msra.mxu0 0
    %284 = vmatprep.subr.bf16.mxu0 0
    %285 = vmatpush1.bf16.msra.mxu0 0
    %286 = vmatprep.subr.bf16.mxu0 0
    %287 = vmatpush1.bf16.msra.mxu0 0
    %288 = vmatprep.subr.bf16.mxu0 0
    %289 = vmatpush1.bf16.msra.mxu0 0
    %290 = vmatprep.subr.bf16.mxu0 0
    %291 = vmatpush1.bf16.msra.mxu0 0
    %292 = vmatprep.subr.bf16.mxu0 0
    %293 = vmatpush1.bf16.msra.mxu0 0
    %294 = vmatprep.subr.bf16.mxu0 0
    %295 = vmatpush1.bf16.msra.mxu0 0
    %296 = vmatprep.subr.bf16.mxu0 0
    %297 = vmatpush1.bf16.msra.mxu0 0
    %298 = vmatprep.subr.bf16.mxu0 0
    %299 = vmatpush1.bf16.msra.mxu0 0
    %300 = vmatprep.subr.bf16.mxu0 0
    %301 = vmatpush1.bf16.msra.mxu0 0
    %302 = vmatprep.subr.bf16.mxu0 0
    %303 = vmatpush1.bf16.msra.mxu0 0
    %304 = vmatprep.mubr.bf16.mxu0 0
    %305 = vmatmul.mubr.bf16.gmra.mrb[0].mxu0 %v227
    %v306 = vpop.f32.mrb[0].mxu0
    %v307 = vadd.f32 0.0, %v306
    %v308 = vpop.f32.mrb[0].mxu0
    %v309 = vpop.f32.mrb[0].mxu0
    %v310 = vadd.f32 0.0, %v309
    %v311 = vpop.f32.mrb[0].mxu0
    %312 = vdwg.mxu0
    %v313 = vld [vmem:[%s3 + $0x21] sm:$0x1]
    %v314 = vlaneseq
    %v315 = vshrl.u32 %v314, 7
    %v316 = vsub.s32 0, %v315
    %v317 = vrot.slane %v313, %v316
    %v318 = vadd.f32 %v264, %v317
    %v319 = vadd.f32 %v268, %v317
    %v320 = vpack.c.bf16 %v319, %v318
    %v321 = vld [vmem:[%s3 + $0x22] sm:$0x1]
    %v322 = vlaneseq
    %v323 = vshrl.u32 %v322, 7
    %v324 = vsub.s32 0, %v323
    %v325 = vrot.slane %v321, %v324
    %v326 = vadd.f32 %v266, %v325
    %v327 = vadd.f32 %v270, %v325
    %v328 = vpack.c.bf16 %v327, %v326
    %v329 = vld [vmem:[%s3 + $0x23] sm:$0x1]
    %v330 = vlaneseq
    %v331 = vshrl.u32 %v330, 7
    %v332 = vsub.s32 0, %v331
    %v333 = vrot.slane %v329, %v332
    %v334 = vadd.f32 %v307, %v333
    %v335 = vadd.f32 %v310, %v333
    %v336 = vpack.c.bf16 %v335, %v334
    %v337 = vld [vmem:[%s3] sm:$0xff]
    %v338 = vld [vmem:[%s3 + $0x8] sm:$0xff]
    %v340 = vsel %vm157, %v320, 0
    %v343 = vsel %vm157, %v328, 0
    %345 = vmatprep.subr.bf16.mxu0 0
    %346 = vmatpush1.bf16.xpose.msra.mxu0 %v343
    %347 = vmatprep.subr.bf16.mxu0 0
    %348 = vmatpush1.bf16.xpose.msra.mxu0 0
    %349 = vmatprep.subr.bf16.mxu0 0
    %350 = vmatpush1.bf16.xpose.msra.mxu0 0
    %351 = vmatprep.subr.bf16.mxu0 0
    %352 = vmatpush1.bf16.xpose.msra.mxu0 0
    %353 = vmatprep.subr.bf16.mxu0 0
    %354 = vmatpush1.bf16.xpose.msra.mxu0 0
    %355 = vmatprep.subr.bf16.mxu0 0
    %356 = vmatpush1.bf16.xpose.msra.mxu0 0
    %357 = vmatprep.subr.bf16.mxu0 0
    %358 = vmatpush1.bf16.xpose.msra.mxu0 0
    %359 = vmatprep.subr.bf16.mxu0 0
    %360 = vmatpush1.bf16.xpose.msra.mxu0 0
    %361 = vmatprep.subr.bf16.mxu0 0
    %362 = vmatpush1.bf16.xpose.msra.mxu0 0
    %363 = vmatprep.subr.bf16.mxu0 0
    %364 = vmatpush1.bf16.xpose.msra.mxu0 0
    %365 = vmatprep.subr.bf16.mxu0 0
    %366 = vmatpush1.bf16.xpose.msra.mxu0 0
    %367 = vmatprep.subr.bf16.mxu0 0
    %368 = vmatpush1.bf16.xpose.msra.mxu0 0
    %369 = vmatprep.subr.bf16.mxu0 0
    %370 = vmatpush1.bf16.xpose.msra.mxu0 0
    %371 = vmatprep.subr.bf16.mxu0 0
    %372 = vmatpush1.bf16.xpose.msra.mxu0 0
    %373 = vmatprep.subr.bf16.mxu0 0
    %374 = vmatpush1.bf16.xpose.msra.mxu0 0
    %375 = vmatprep.subr.bf16.mxu0 0
    %376 = vmatpush1.bf16.xpose.msra.mxu0 0
    %377 = vmatprep.mubr.bf16.mxu0 0
    %378 = vmatmul.mubr.bf16.gmra.mrb[0].mxu0 %v340
    %v379 = vpop.f32.mrb[0].mxu0
    %v380 = vadd.f32 %v337, %v379
    %v381 = vpop.f32.mrb[0].mxu0
    %v382 = vpop.f32.mrb[0].mxu0
    %v383 = vadd.f32 %v338, %v382
    %v384 = vpop.f32.mrb[0].mxu0
    %385 = vdwg.mxu0
    %vm386 = vcmask 130048
    %v387 = vsel %vm386, %v380, -inf
    %388 = vmax.xlane.f32.xlu0 %v387
    %v389 = vpop.xlane.xlu0 %388
    %v390 = vsel %vm386, %v383, -inf
    %391 = vmax.xlane.f32.xlu0 %v390
    %v392 = vpop.xlane.xlu0 %391
    %v393 = vsub.f32 %v380, %v389
    %v394 = vsub.f32 %v383, %v392
    %v395 = vmul.f32 %v393, 1.442695
    %v396 = vpow.pop %v395
    %v397 = vmul.f32 %v394, 1.442695
    %v398 = vpow.pop %v397
    %v399 = vsel %vm386, %v396, 0.0
    %400 = vadd.xlane.f32.xlu0 %v399
    %v401 = vpop.xlane.xlu0 %400
    %v402 = vsel %vm386, %v398, 0.0
    %403 = vadd.xlane.f32.xlu0 %v402
    %v404 = vpop.xlane.xlu0 %403
    %v405 = vrcp.pop %v401
    %v406 = vrcp.pop %v404
    %v407 = vmul.f32 %v396, %v405
    %v408 = vmul.f32 %v398, %v406
    %v409 = vpack.c.bf16 %v408, %v407
    %v411 = vsel %vm386, %v409, 0
    %413 = vmatprep.subr.bf16.mxu0 0
    %414 = vmatpush1.bf16.msra.mxu0 %v336
    %415 = vmatprep.subr.bf16.mxu0 0
    %416 = vmatpush1.bf16.msra.mxu0 0
    %417 = vmatprep.subr.bf16.mxu0 0
    %418 = vmatpush1.bf16.msra.mxu0 0
    %419 = vmatprep.subr.bf16.mxu0 0
    %420 = vmatpush1.bf16.msra.mxu0 0
    %421 = vmatprep.subr.bf16.mxu0 0
    %422 = vmatpush1.bf16.msra.mxu0 0
    %423 = vmatprep.subr.bf16.mxu0 0
    %424 = vmatpush1.bf16.msra.mxu0 0
    %425 = vmatprep.subr.bf16.mxu0 0
    %426 = vmatpush1.bf16.msra.mxu0 0
    %427 = vmatprep.subr.bf16.mxu0 0
    %428 = vmatpush1.bf16.msra.mxu0 0
    %429 = vmatprep.subr.bf16.mxu0 0
    %430 = vmatpush1.bf16.msra.mxu0 0
    %431 = vmatprep.subr.bf16.mxu0 0
    %432 = vmatpush1.bf16.msra.mxu0 0
    %433 = vmatprep.subr.bf16.mxu0 0
    %434 = vmatpush1.bf16.msra.mxu0 0
    %435 = vmatprep.subr.bf16.mxu0 0
    %436 = vmatpush1.bf16.msra.mxu0 0
    %437 = vmatprep.subr.bf16.mxu0 0
    %438 = vmatpush1.bf16.msra.mxu0 0
    %439 = vmatprep.subr.bf16.mxu0 0
    %440 = vmatpush1.bf16.msra.mxu0 0
    %441 = vmatprep.subr.bf16.mxu0 0
    %442 = vmatpush1.bf16.msra.mxu0 0
    %443 = vmatprep.subr.bf16.mxu0 0
    %444 = vmatpush1.bf16.msra.mxu0 0
    %445 = vmatprep.mubr.bf16.mxu0 0
    %446 = vmatmul.mubr.bf16.gmra.mrb[0].mxu0 %v411
    %v447 = vpop.f32.mrb[0].mxu0
    %v448 = vadd.f32 0.0, %v447
    %v449 = vpop.f32.mrb[0].mxu0
    %v450 = vpop.f32.mrb[0].mxu0
    %v451 = vadd.f32 0.0, %v450
    %v452 = vpop.f32.mrb[0].mxu0
    %453 = vdwg.mxu0
    %v454 = vpack.c.bf16 %v451, %v448
    %v455 = vld [vmem:[#allocation2 + $0x10] sm:$0xf]
    %v456 = vld [vmem:[#allocation2 + $0x2c] sm:$0xf]
    %v457 = vld [vmem:[#allocation2 + $0x48] sm:$0xf]
    %v458 = vld [vmem:[#allocation2 + $0x64] sm:$0xf]
    %v463 = vunpack.c.l.b16 %v455
    %v464 = vunpack.c.l.b16 %v456
    %v465 = vunpack.c.l.b16 %v457
    %v466 = vunpack.c.l.b16 %v458
    %v467 = vpack.c.b16 %v464, %v463
    %v468 = vpack.c.b16 %v466, %v465
    %v472 = vsel %vm157, %v454, 0
    %474 = vmatprep.subr.bf16.mxu0 0
    %475 = vmatpush1.bf16.msra.mxu0 %v467
    %476 = vmatprep.subr.bf16.mxu0 0
    %477 = vmatpush1.bf16.msra.mxu0 %v468
    %478 = vmatprep.subr.bf16.mxu0 0
    %479 = vmatpush1.bf16.msra.mxu0 0
    %480 = vmatprep.subr.bf16.mxu0 0
    %481 = vmatpush1.bf16.msra.mxu0 0
    %482 = vmatprep.subr.bf16.mxu0 0
    %483 = vmatpush1.bf16.msra.mxu0 0
    %484 = vmatprep.subr.bf16.mxu0 0
    %485 = vmatpush1.bf16.msra.mxu0 0
    %486 = vmatprep.subr.bf16.mxu0 0
    %487 = vmatpush1.bf16.msra.mxu0 0
    %488 = vmatprep.subr.bf16.mxu0 0
    %489 = vmatpush1.bf16.msra.mxu0 0
    %490 = vmatprep.subr.bf16.mxu0 0
    %491 = vmatpush1.bf16.msra.mxu0 0
    %492 = vmatprep.subr.bf16.mxu0 0
    %493 = vmatpush1.bf16.msra.mxu0 0
    %494 = vmatprep.subr.bf16.mxu0 0
    %495 = vmatpush1.bf16.msra.mxu0 0
    %496 = vmatprep.subr.bf16.mxu0 0
    %497 = vmatpush1.bf16.msra.mxu0 0
    %498 = vmatprep.subr.bf16.mxu0 0
    %499 = vmatpush1.bf16.msra.mxu0 0
    %500 = vmatprep.subr.bf16.mxu0 0
    %501 = vmatpush1.bf16.msra.mxu0 0
    %502 = vmatprep.subr.bf16.mxu0 0
    %503 = vmatpush1.bf16.msra.mxu0 0
    %504 = vmatprep.subr.bf16.mxu0 0
    %505 = vmatpush1.bf16.msra.mxu0 0
    %506 = vmatprep.mubr.bf16.mxu0 0
    %507 = vmatmul.mubr.bf16.gmra.mrb[0].mxu0 %v472
    %v508 = vpop.f32.mrb[0].mxu0
    %v509 = vadd.f32 0.0, %v508
    %v510 = vpop.f32.mrb[0].mxu0
    %v511 = vpop.f32.mrb[0].mxu0
    %v512 = vadd.f32 0.0, %v511
    %v513 = vpop.f32.mrb[0].mxu0
    %514 = vdwg.mxu0
    %v515 = vadd.f32 %v151, %v509
    %v516 = vadd.f32 %v154, %v512
    %v517 = vsel %vm157, %v515, 0.0
    %518 = vadd.xlane.f32.xlu0 %v517
    %v519 = vpop.xlane.xlu0 %518
    %v520 = vsel %vm157, %v516, 0.0
    %521 = vadd.xlane.f32.xlu0 %v520
    %v522 = vpop.xlane.xlu0 %521
    %v523 = vmul.f32 %v519, %v164
    %v524 = vmul.f32 %v522, %v164
    %v525 = vsub.f32 %v515, %v523
    %v526 = vsub.f32 %v516, %v524
    %v527 = vmul.f32 %v525, %v525
    %v528 = vmul.f32 %v526, %v526
    %v529 = vsel %vm157, %v527, 0.0
    %530 = vadd.xlane.f32.xlu0 %v529
    %v531 = vpop.xlane.xlu0 %530
    %v532 = vsel %vm157, %v528, 0.0
    %533 = vadd.xlane.f32.xlu0 %v532
    %v534 = vpop.xlane.xlu0 %533
    %v535 = vmul.f32 %v531, %v164
    %v536 = vmul.f32 %v534, %v164
    %v537 = vadd.f32 %v535, 1e-05
    %v538 = vadd.f32 %v536, 1e-05
    %v539 = vrsqrt.pop %v537
    %v540 = vrsqrt.pop %v538
    %v541 = vmul.f32 %v525, %v539
    %v542 = vmul.f32 %v526, %v540
    %v543 = vpack.c.bf16 %v542, %v541
    %v544 = vld [vmem:[#allocation2 + $0x14] sm:$0xf]
    %v545 = vld [vmem:[#allocation2 + $0x30] sm:$0xf]
    %v546 = vld [vmem:[#allocation2 + $0x4c] sm:$0xf]
    %v547 = vld [vmem:[#allocation2 + $0x68] sm:$0xf]
    %v548 = vld [vmem:[%s3 + $0x24] sm:$0x1]
    %v549 = vlaneseq
    %v550 = vshrl.u32 %v549, 7
    %v551 = vsub.s32 0, %v550
    %v552 = vrot.slane %v548, %v551
    %v557 = vunpack.c.l.b16 %v544
    %v558 = vunpack.c.l.b16 %v545
    %v559 = vunpack.c.l.b16 %v546
    %v560 = vunpack.c.l.b16 %v547
    %v561 = vpack.c.b16 %v558, %v557
    %v562 = vpack.c.b16 %v560, %v559
    %v566 = vsel %vm157, %v543, 0
    %568 = vmatprep.subr.bf16.mxu0 0
    %569 = vmatpush1.bf16.msra.mxu0 %v561
    %570 = vmatprep.subr.bf16.mxu0 0
    %571 = vmatpush1.bf16.msra.mxu0 %v562
    %572 = vmatprep.subr.bf16.mxu0 0
    %573 = vmatpush1.bf16.msra.mxu0 0
    %574 = vmatprep.subr.bf16.mxu0 0
    %575 = vmatpush1.bf16.msra.mxu0 0
    %576 = vmatprep.subr.bf16.mxu0 0
    %577 = vmatpush1.bf16.msra.mxu0 0
    %578 = vmatprep.subr.bf16.mxu0 0
    %579 = vmatpush1.bf16.msra.mxu0 0
    %580 = vmatprep.subr.bf16.mxu0 0
    %581 = vmatpush1.bf16.msra.mxu0 0
    %582 = vmatprep.subr.bf16.mxu0 0
    %583 = vmatpush1.bf16.msra.mxu0 0
    %584 = vmatprep.subr.bf16.mxu0 0
    %585 = vmatpush1.bf16.msra.mxu0 0
    %586 = vmatprep.subr.bf16.mxu0 0
    %587 = vmatpush1.bf16.msra.mxu0 0
    %588 = vmatprep.subr.bf16.mxu0 0
    %589 = vmatpush1.bf16.msra.mxu0 0
    %590 = vmatprep.subr.bf16.mxu0 0
    %591 = vmatpush1.bf16.msra.mxu0 0
    %592 = vmatprep.subr.bf16.mxu0 0
    %593 = vmatpush1.bf16.msra.mxu0 0
    %594 = vmatprep.subr.bf16.mxu0 0
    %595 = vmatpush1.bf16.msra.mxu0 0
    %596 = vmatprep.subr.bf16.mxu0 0
    %597 = vmatpush1.bf16.msra.mxu0 0
    %598 = vmatprep.subr.bf16.mxu0 0
    %599 = vmatpush1.bf16.msra.mxu0 0
    %600 = vmatprep.mubr.bf16.mxu0 0
    %601 = vmatmul.mubr.bf16.gmra.mrb[0].mxu0 %v566
    %v602 = vpop.f32.mrb[0].mxu0
    %v603 = vadd.f32 %v552, %v602
    %v604 = vpop.f32.mrb[0].mxu0
    %v605 = vpop.f32.mrb[0].mxu0
    %v606 = vadd.f32 %v552, %v605
    %v607 = vpop.f32.mrb[0].mxu0
    %608 = vdwg.mxu0
    %v609 = vmul.f32 %v603, %v603
    %v610 = vmul.f32 %v606, %v606
    %v611 = vmul.f32 %v603, %v609
    %v612 = vmul.f32 %v606, %v610
    %v613 = vmul.f32 %v611, 0.044715
    %v614 = vmul.f32 %v612, 0.044715
    %v615 = vadd.f32 %v603, %v613
    %v616 = vadd.f32 %v606, %v614
    %v617 = vmul.f32 %v615, 0.7978846
    %v618 = vmul.f32 %v616, 0.7978846
    %v619 = vtanh.pop %v617
    %v620 = vtanh.pop %v618
    %v621 = vadd.f32 %v619, 1.0
    %v622 = vadd.f32 %v620, 1.0
    %v623 = vmul.f32 %v621, 0.5
    %v624 = vmul.f32 %v622, 0.5
    %v625 = vmul.f32 %v603, %v623
    %v626 = vmul.f32 %v606, %v624
    %v627 = vpack.c.bf16 %v626, %v625
    %v628 = vld [vmem:[#allocation2 + $0x18] sm:$0xf]
    %v629 = vld [vmem:[#allocation2 + $0x34] sm:$0xf]
    %v630 = vld [vmem:[#allocation2 + $0x50] sm:$0xf]
    %v631 = vld [vmem:[#allocation2 + $0x6c] sm:$0xf]
    %v636 = vunpack.c.l.b16 %v628
    %v637 = vunpack.c.l.b16 %v629
    %v638 = vunpack.c.l.b16 %v630
    %v639 = vunpack.c.l.b16 %v631
    %v640 = vpack.c.b16 %v637, %v636
    %v641 = vpack.c.b16 %v639, %v638
    %vm642 = vcmask 523264
    %v644 = vsel %vm642, %v627, 0
    %v647 = vsel %vm642, %v640, 0
    %v650 = vsel %vm642, %v641, 0
    %652 = vmatprep.subr.bf16.mxu0 0
    %653 = vmatpush1.bf16.xpose.msra.mxu0 %v647
    %654 = vmatprep.subr.bf16.mxu0 0
    %655 = vmatpush1.bf16.xpose.msra.mxu0 %v650
    %656 = vmatprep.subr.bf16.mxu0 0
    %657 = vmatpush1.bf16.xpose.msra.mxu0 0
    %658 = vmatprep.subr.bf16.mxu0 0
    %659 = vmatpush1.bf16.xpose.msra.mxu0 0
    %660 = vmatprep.subr.bf16.mxu0 0
    %661 = vmatpush1.bf16.xpose.msra.mxu0 0
    %662 = vmatprep.subr.bf16.mxu0 0
    %663 = vmatpush1.bf16.xpose.msra.mxu0 0
    %664 = vmatprep.subr.bf16.mxu0 0
    %665 = vmatpush1.bf16.xpose.msra.mxu0 0
    %666 = vmatprep.subr.bf16.mxu0 0
    %667 = vmatpush1.bf16.xpose.msra.mxu0 0
    %668 = vmatprep.subr.bf16.mxu0 0
    %669 = vmatpush1.bf16.xpose.msra.mxu0 0
    %670 = vmatprep.subr.bf16.mxu0 0
    %671 = vmatpush1.bf16.xpose.msra.mxu0 0
    %672 = vmatprep.subr.bf16.mxu0 0
    %673 = vmatpush1.bf16.xpose.msra.mxu0 0
    %674 = vmatprep.subr.bf16.mxu0 0
    %675 = vmatpush1.bf16.xpose.msra.mxu0 0
    %676 = vmatprep.subr.bf16.mxu0 0
    %677 = vmatpush1.bf16.xpose.msra.mxu0 0
    %678 = vmatprep.subr.bf16.mxu0 0
    %679 = vmatpush1.bf16.xpose.msra.mxu0 0
    %680 = vmatprep.subr.bf16.mxu0 0
    %681 = vmatpush1.bf16.xpose.msra.mxu0 0
    %682 = vmatprep.subr.bf16.mxu0 0
    %683 = vmatpush1.bf16.xpose.msra.mxu0 0
    %684 = vmatprep.mubr.bf16.mxu0 0
    %685 = vmatmul.mubr.bf16.gmra.mrb[0].mxu0 %v644
    %v686 = vpop.f32.mrb[0].mxu0
    %v687 = vadd.f32 0.0, %v686
    %v688 = vpop.f32.mrb[0].mxu0
    %v689 = vpop.f32.mrb[0].mxu0
    %v690 = vadd.f32 0.0, %v689
    %v691 = vpop.f32.mrb[0].mxu0
    %692 = vdwg.mxu0
    %v693 = vadd.f32 %v515, %v687
    %v694 = vadd.f32 %v516, %v690
    %v695 = vsel %vm157, %v693, 0.0
    %696 = vadd.xlane.f32.xlu0 %v695
    %v697 = vpop.xlane.xlu0 %696
    %v698 = vsel %vm157, %v694, 0.0
    %699 = vadd.xlane.f32.xlu0 %v698
    %v700 = vpop.xlane.xlu0 %699
    %v701 = vmul.f32 %v697, %v164
    %v702 = vmul.f32 %v700, %v164
    %v703 = vsub.f32 %v693, %v701
    %v704 = vsub.f32 %v694, %v702
    %v705 = vmul.f32 %v703, %v703
    %v706 = vmul.f32 %v704, %v704
    %v707 = vsel %vm157, %v705, 0.0
    %708 = vadd.xlane.f32.xlu0 %v707
    %v709 = vpop.xlane.xlu0 %708
    %v710 = vsel %vm157, %v706, 0.0
    %711 = vadd.xlane.f32.xlu0 %v710
    %v712 = vpop.xlane.xlu0 %711
    %v713 = vmul.f32 %v709, %v164
    %v714 = vmul.f32 %v712, %v164
    %v715 = vadd.f32 %v713, 1e-05
    %v716 = vadd.f32 %v714, 1e-05
    %v717 = vrsqrt.pop %v715
    %v718 = vrsqrt.pop %v716
    %v719 = vmul.f32 %v703, %v717
    %v720 = vmul.f32 %v704, %v718
    %v721 = vpack.c.bf16 %v720, %v719
    %v722 = vld [vmem:[#allocation2] sm:$0xf]
    %v723 = vld [vmem:[#allocation2 + $0x1c] sm:$0xf]
    %v724 = vld [vmem:[#allocation2 + $0x38] sm:$0xf]
    %v725 = vld [vmem:[#allocation2 + $0x54] sm:$0xf]
    %v726 = vld [vmem:[%s3 + $0x20] sm:$0x1]
    %v727 = vlaneseq
    %v728 = vshrl.u32 %v727, 7
    %v729 = vsub.s32 0, %v728
    %v730 = vrot.slane %v726, %v729
    %v735 = vunpack.c.l.b16 %v722
    %v736 = vunpack.c.l.b16 %v723
    %v737 = vunpack.c.l.b16 %v724
    %v738 = vunpack.c.l.b16 %v725
    %v739 = vpack.c.b16 %v736, %v735
    %v740 = vpack.c.b16 %v738, %v737
    %v744 = vsel %vm157, %v721, 0
    %746 = vmatprep.subr.bf16.mxu0 0
    %747 = vmatpush1.bf16.msra.mxu0 %v739
    %748 = vmatprep.subr.bf16.mxu0 0
    %749 = vmatpush1.bf16.msra.mxu0 %v740
    %750 = vmatprep.subr.bf16.mxu0 0
    %751 = vmatpush1.bf16.msra.mxu0 0
    %752 = vmatprep.subr.bf16.mxu0 0
    %753 = vmatpush1.bf16.msra.mxu0 0
    %754 = vmatprep.subr.bf16.mxu0 0
    %755 = vmatpush1.bf16.msra.mxu0 0
    %756 = vmatprep.subr.bf16.mxu0 0
    %757 = vmatpush1.bf16.msra.mxu0 0
    %758 = vmatprep.subr.bf16.mxu0 0
    %759 = vmatpush1.bf16.msra.mxu0 0
    %760 = vmatprep.subr.bf16.mxu0 0
    %761 = vmatpush1.bf16.msra.mxu0 0
    %762 = vmatprep.subr.bf16.mxu0 0
    %763 = vmatpush1.bf16.msra.mxu0 0
    %764 = vmatprep.subr.bf16.mxu0 0
    %765 = vmatpush1.bf16.msra.mxu0 0
    %766 = vmatprep.subr.bf16.mxu0 0
    %767 = vmatpush1.bf16.msra.mxu0 0
    %768 = vmatprep.subr.bf16.mxu0 0
    %769 = vmatpush1.bf16.msra.mxu0 0
    %770 = vmatprep.subr.bf16.mxu0 0
    %771 = vmatpush1.bf16.msra.mxu0 0
    %772 = vmatprep.subr.bf16.mxu0 0
    %773 = vmatpush1.bf16.msra.mxu0 0
    %774 = vmatprep.subr.bf16.mxu0 0
    %775 = vmatpush1.bf16.msra.mxu0 0
    %776 = vmatprep.subr.bf16.mxu0 0
    %777 = vmatpush1.bf16.msra.mxu0 0
    %778 = vmatprep.mubr.bf16.mxu0 0
    %779 = vmatmul.mubr.bf16.gmra.mrb[0].mxu0 %v744
    %v780 = vpop.f32.mrb[0].mxu0
    %v781 = vadd.f32 %v730, %v780
    %v782 = vpop.f32.mrb[0].mxu0
    %v783 = vpop.f32.mrb[0].mxu0
    %v784 = vadd.f32 %v730, %v783
    %v785 = vpop.f32.mrb[0].mxu0
    %786 = vdwg.mxu0
    %787 = vst [vmem:[#allocation5] sm:$0xff] %v781
    %788 = vst [vmem:[#allocation5 + $0x8] sm:$0xff] %v784
    // Predicated region
    $region22: #{trace_wrapper_forward.1} parent=1 // pred_check
      _
    $region23: #{trace_wrapper_forward.1} parent=1 // pred_check_branch
      %790 = sbr.rel (0) target = $region25
    $region24: #{trace_wrapper_forward.1} parent=1 // pred_region
      %s792 = ssub.s32 256, 256
      %793 = vsyncadd [#allocation4], %s792
      %s794 = sshll.u32 [#allocation5], 4
      %s795 = int_to_ptr.vmem [resolvable:$true] %s794
      %800 = dma.vmem_to_hbm [thread:$0]  %s795, 256, %s4, [#allocation4], 128, 128, 8
    $region25: #{trace_wrapper_forward.1} parent=1 // pred_fallthru
      _
    // Predicated region
    $region26: #{trace_wrapper_forward.1} parent=1 // pred_check
      _
    $region27: #{trace_wrapper_forward.1} parent=1 // pred_check_branch
      %802 = sbr.rel (0) target = $region29
    $region28: #{trace_wrapper_forward.1} parent=1 // pred_region
      %803 = dma.done [#allocation4], 256
    $region29: #{trace_wrapper_forward.1} parent=1 // pred_fallthru
      _
    %804 = vsyncpa [#allocation3], 1
    %805 = vsyncpa [#allocation4], 1

</llo_original>
